<compile_context>
chip_gen: v7x
topology: tpu7x:2x2x1
jax: 0.10.0
libtpu: 0.0.40
codegen_flags: <defaults>
</compile_context>

<pallas_src>
import jax
import jax.numpy as jnp
from jax.experimental import pallas as pl
from jax.experimental.pallas import tpu as pltpu


def _round_up(x, m):
    return (x + m - 1) // m * m


def _num_tensorcores():
    # v7x packs 2 TensorCores per chip; v5e/v6e have 1.  The "parallel" grid
    # axis only engages both cores when the grid has >= 2 steps.
    try:
        kind = jax.devices()[0].device_kind.lower()
        return 2 if "v7" in kind else 1
    except Exception:
        return 1


def value_network_kernel(x_ref, w1_ref, b1_ref, w2_ref, b2_ref, w3_ref, b3_ref,
                         o_ref):
    # x_ref: (TB, num_inputs) f32   w1_ref: (num_inputs, Hp) bf16
    # b1_ref/b2_ref/w3_ref: (1, Hp) f32   w2_ref: (Hp, Hp) bf16
    # b3_ref: (1,) f32 in SMEM      o_ref: (1, TB) f32 (lane-dense batch)
    x = x_ref[...]

    # Layer 1: MXU matmul, bf16 operands, f32 accumulation; bias+ReLU in f32.
    h1 = jnp.dot(x.astype(jnp.bfloat16), w1_ref[...],
                 preferred_element_type=jnp.float32)
    h1 = jnp.maximum(h1 + b1_ref[...], 0.0)

    # Layer 2: same pattern.
    h2 = jnp.dot(h1.astype(jnp.bfloat16), w2_ref[...],
                 preferred_element_type=jnp.float32)
    h2 = jnp.maximum(h2 + b2_ref[...], 0.0)                     # (TB, Hp) f32

    # Layer 3 (H -> 1): VPU multiply + XLU lane reduction; store lane-dense.
    row = jnp.sum(h2 * w3_ref[...], axis=-1) + b3_ref[0]        # (TB,) f32
    o_ref[...] = row[None, :].astype(o_ref.dtype)


def pack_value_network_params(params):
    """One-time packing (do NOT call per forward): pad hidden to a multiple of
    128 lanes (numerically neutral: padded units are exactly 0 after ReLU and
    multiply against zero weight rows), cast matmul weights to bf16, reshape
    biases / w3 to (1, Hp) rows and b3 to a (1,) SMEM scalar."""
    hidden = params["w1"].shape[1]
    Hp = _round_up(hidden, 128)
    ph = Hp - hidden
    return {
        "w1": jnp.pad(params["w1"], ((0, 0), (0, ph))).astype(jnp.bfloat16),
        "b1": jnp.pad(params["b1"], (0, ph)).reshape(1, Hp).astype(jnp.float32),
        "w2": jnp.pad(params["w2"], ((0, ph), (0, ph))).astype(jnp.bfloat16),
        "b2": jnp.pad(params["b2"], (0, ph)).reshape(1, Hp).astype(jnp.float32),
        "w3": jnp.pad(params["w3"].reshape(-1), (0, ph))
                 .reshape(1, Hp).astype(jnp.float32),
        "b3": params["b3"].reshape(1).astype(jnp.float32),
    }


def _choose_tiling(B, batch_tile, num_cores):
    # Largest tile that doesn't exceed the (sublane-rounded) batch.
    TB = min(batch_tile, _round_up(B, 8))
    if num_cores > 1:
        # Guarantee >= num_cores grid steps so the parallel axis shards.
        TB = min(TB, max(8, _round_up(pl.cdiv(B, num_cores), 8)))
    n_tiles = pl.cdiv(B, TB)
    if num_cores > 1 and n_tiles > 1 and n_tiles % num_cores:
        # Prefer an even step count so no TensorCore idles on the last step.
        n_even = _round_up(n_tiles, num_cores)
        TB = max(8, _round_up(pl.cdiv(B, n_even), 8))
        n_tiles = pl.cdiv(B, TB)
    return TB, n_tiles


def value_network_forward(state, packed, *, batch_tile=2048):
    """state: (B, num_inputs) f32.  packed: pack_value_network_params output."""
    B, num_inputs = state.shape
    Hp = packed["w1"].shape[1]

    num_cores = _num_tensorcores()
    TB, n_tiles = _choose_tiling(B, batch_tile, num_cores)

    # Explicit VMEM budget: f32 h1/h2 intermediates, double-buffered x tile and
    # output slab, weights budgeted double-buffered (in case the single-buffer
    # request below is unsupported), plus lane/sublane padding and headroom.
    est = (2 * TB * Hp * 4                               # h1 + h2 (f32)
           + 2 * TB * _round_up(num_inputs, 128) * 4     # x tile, 2 buffers
           + 2 * (num_inputs * Hp + Hp * Hp) * 2         # bf16 w1 + w2
           + 3 * 8 * Hp * 4                              # b1/b2/w3 rows
           + 2 * 8 * TB * 4)                             # (1, TB) out, 2 buffers
    vmem_limit = int(min(max(est * 1.25 + (1 << 20), 16 << 20), 64 << 20))

    def _run(single_buffer_weights):
        def wspec(shape):
            idx = lambda i, _n=len(shape): (0,) * _n
            if single_buffer_weights:
                # Blocks never change across the grid -> single buffer halves
                # their VMEM footprint (matters on v7x's 64 MiB).
                return pl.BlockSpec(shape, idx, pipeline_mode=pl.Buffered(1))
            return pl.BlockSpec(shape, idx)

        return pl.pallas_call(
            value_network_kernel,
            out_shape=jax.ShapeDtypeStruct((n_tiles, 1, TB), jnp.float32),
            grid=(n_tiles,),
            in_specs=[
                pl.BlockSpec((TB, num_inputs), lambda i: (i, 0)),  # state tile
                wspec((num_inputs, Hp)),                           # w1 (resident)
                wspec((1, Hp)),                                    # b1
                wspec((Hp, Hp)),                                   # w2 (resident)
                wspec((1, Hp)),                                    # b2
                wspec((1, Hp)),                                    # w3 as a row
                pl.BlockSpec(memory_space=pltpu.MemorySpace.SMEM),  # b3 scalar
            ],
            out_specs=pl.BlockSpec((None, 1, TB), lambda i: (i, 0, 0)),
            compiler_params=pltpu.CompilerParams(
                dimension_semantics=("parallel",),
                vmem_limit_bytes=vmem_limit),
        )(state, packed["w1"], packed["b1"], packed["w2"], packed["b2"],
          packed["w3"], packed["b3"])

    try:
        out = _run(True)
    except Exception:
        # pipeline_mode=pl.Buffered(1) not supported on this jax version ->
        # fall back to default double-buffered resident weights (still correct).
        out = _run(False)

    # (n_tiles, 1, TB) lane-dense slabs -> (B, 1) column; rows >= B (ragged
    # last input block) are garbage by design and sliced off here.
    return out.reshape(n_tiles * TB, 1)[:B]


def xavier_uniform(key, shape):
    # shape = (in_features, out_features); gain=1 matches torch xavier_uniform_
    fan_in, fan_out = shape
    limit = (6.0 / (fan_in + fan_out)) ** 0.5
    return jax.random.uniform(key, shape, jnp.float32, -limit, limit)


def init_value_network_params(key, num_inputs, hidden_dim):
    k1, k2, k3 = jax.random.split(key, 3)
    return {
        "w1": xavier_uniform(k1, (num_inputs, hidden_dim)),
        "b1": jnp.zeros((hidden_dim,), jnp.float32),
        "w2": xavier_uniform(k2, (hidden_dim, hidden_dim)),
        "b2": jnp.zeros((hidden_dim,), jnp.float32),
        "w3": xavier_uniform(k3, (hidden_dim, 1)),
        "b3": jnp.zeros((1,), jnp.float32),
    }


def value_network_ref(state, p):
    """Pure-JAX reference mirroring the kernel's bf16 matmul operands."""
    bf16 = jnp.bfloat16
    h = jnp.dot(state.astype(bf16), p["w1"].astype(bf16),
                preferred_element_type=jnp.float32) + p["b1"]
    h = jnp.maximum(h, 0.0)
    h = jnp.dot(h.astype(bf16), p["w2"].astype(bf16),
                preferred_element_type=jnp.float32) + p["b2"]
    h = jnp.maximum(h, 0.0)
    return jnp.dot(h, p["w3"], preferred_element_type=jnp.float32) + p["b3"]


if __name__ == "__main__":
    key = jax.random.PRNGKey(0)
    k_state, k_params, k_state2 = jax.random.split(key, 3)

    # Small demo shapes matching the module (SAC value head).
    B, num_inputs, hidden_dim = 8, 16, 32
    state = jax.random.normal(k_state, (B, num_inputs), jnp.float32)
    params = init_value_network_params(k_params, num_inputs, hidden_dim)
    packed = pack_value_network_params(params)   # one-time weight packing

    out = jax.block_until_ready(value_network_forward(state, packed))
    ref = value_network_ref(state, params)
    assert out.shape == (B, 1), out.shape
    assert jnp.allclose(out, ref, atol=2e-3, rtol=2e-3), "mismatch vs reference"

    # Ragged batch (B not a multiple of 8 or of the tile): single partial block
    # on 1-core chips, two tiles on v7x — no wrapper-side pad either way.
    B2 = 300
    state2 = jax.random.normal(k_state2, (B2, num_inputs), jnp.float32)
    out2 = jax.block_until_ready(value_network_forward(state2, packed))
    ref2 = value_network_ref(state2, params)
    assert out2.shape == (B2, 1), out2.shape
    assert jnp.allclose(out2, ref2, atol=2e-3, rtol=2e-3), "mismatch (ragged)"

    # Force a multi-tile grid with a ragged last block on every chip.
    out3 = jax.block_until_ready(
        value_network_forward(state2, packed, batch_tile=128))
    assert out3.shape == (B2, 1), out3.shape
    assert jnp.allclose(out3, ref2, atol=2e-3, rtol=2e-3), "mismatch (tiled)"

    print("KERNEL_OK")
</pallas_src>

<mosaic_0001>
module attributes {stable_mosaic.version = 11 : i64} {
  func.func @value_network_kernel(%arg0: i32, %arg1: memref<8x16xf32, #tpu.memory_space<vmem>>, %arg2: memref<16x128xbf16, #tpu.memory_space<vmem>>, %arg3: memref<1x128xf32, #tpu.memory_space<vmem>>, %arg4: memref<128x128xbf16, #tpu.memory_space<vmem>>, %arg5: memref<1x128xf32, #tpu.memory_space<vmem>>, %arg6: memref<1x128xf32, #tpu.memory_space<vmem>>, %arg7: memref<1xf32, #tpu.memory_space<smem>>, %arg8: memref<1x1x8xf32, #tpu.memory_space<vmem>>) attributes {dimension_semantics = [#tpu.dimension_semantics<parallel>], iteration_bounds = array<i64: 1>, scalar_prefetch = 0 : i64, scratch_operands = 0 : i64, tpu.core_type = #tpu.core_type<tc>, window_params = [{transform_indices = @transform_0, window_bounds = array<i64: 8, 16>}, {pipeline_mode = #tpu.pipeline_mode<synchronous>, transform_indices = @transform_1, window_bounds = array<i64: 16, 128>}, {pipeline_mode = #tpu.pipeline_mode<synchronous>, transform_indices = @transform_2, window_bounds = array<i64: 1, 128>}, {pipeline_mode = #tpu.pipeline_mode<synchronous>, transform_indices = @transform_3, window_bounds = array<i64: 128, 128>}, {pipeline_mode = #tpu.pipeline_mode<synchronous>, transform_indices = @transform_4, window_bounds = array<i64: 1, 128>}, {pipeline_mode = #tpu.pipeline_mode<synchronous>, transform_indices = @transform_5, window_bounds = array<i64: 1, 128>}, {transform_indices = @transform_6, window_bounds = array<i64: 1>}, {transform_indices = @transform_7, window_bounds = array<i64: 1, 1, 8>}]} {
    %c0 = arith.constant 0 : index
    %c0_0 = arith.constant 0 : index
    %0 = vector.load %arg1[%c0, %c0_0] : memref<8x16xf32, #tpu.memory_space<vmem>>, vector<8x16xf32>
    %1 = arith.truncf %0 : vector<8x16xf32> to vector<8x16xbf16>
    %c0_1 = arith.constant 0 : index
    %c0_2 = arith.constant 0 : index
    %2 = vector.load %arg2[%c0_1, %c0_2] : memref<16x128xbf16, #tpu.memory_space<vmem>>, vector<16x128xbf16>
    %cst = arith.constant dense<0.000000e+00> : vector<8x128xf32>
    %3 = tpu.matmul %1, %2, %cst {dimension_numbers = #tpu.dot_dimension_numbers<[1], [0], [0], [1], [0, 0, 1, 1], [], []>} : vector<8x16xbf16>, vector<16x128xbf16>, vector<8x128xf32> -> vector<8x128xf32>
    %c0_3 = arith.constant 0 : index
    %c0_4 = arith.constant 0 : index
    %4 = vector.load %arg3[%c0_3, %c0_4] : memref<1x128xf32, #tpu.memory_space<vmem>>, vector<1x128xf32>
    %5 = vector.broadcast %4 : vector<1x128xf32> to vector<8x128xf32>
    %6 = arith.addf %3, %5 : vector<8x128xf32>
    %cst_5 = arith.constant 0.000000e+00 : f32
    %7 = vector.broadcast %cst_5 : f32 to vector<8x128xf32>
    %8 = arith.maximumf %6, %7 : vector<8x128xf32>
    %9 = arith.truncf %8 : vector<8x128xf32> to vector<8x128xbf16>
    %c0_6 = arith.constant 0 : index
    %c0_7 = arith.constant 0 : index
    %10 = vector.load %arg4[%c0_6, %c0_7] : memref<128x128xbf16, #tpu.memory_space<vmem>>, vector<128x128xbf16>
    %cst_8 = arith.constant dense<0.000000e+00> : vector<8x128xf32>
    %11 = tpu.matmul %9, %10, %cst_8 {dimension_numbers = #tpu.dot_dimension_numbers<[1], [0], [0], [1], [0, 0, 1, 1], [], []>} : vector<8x128xbf16>, vector<128x128xbf16>, vector<8x128xf32> -> vector<8x128xf32>
    %c0_9 = arith.constant 0 : index
    %c0_10 = arith.constant 0 : index
    %12 = vector.load %arg5[%c0_9, %c0_10] : memref<1x128xf32, #tpu.memory_space<vmem>>, vector<1x128xf32>
    %13 = vector.broadcast %12 : vector<1x128xf32> to vector<8x128xf32>
    %14 = arith.addf %11, %13 : vector<8x128xf32>
    %cst_11 = arith.constant 0.000000e+00 : f32
    %15 = vector.broadcast %cst_11 : f32 to vector<8x128xf32>
    %16 = arith.maximumf %14, %15 : vector<8x128xf32>
    %c0_12 = arith.constant 0 : index
    %c0_13 = arith.constant 0 : index
    %17 = vector.load %arg6[%c0_12, %c0_13] : memref<1x128xf32, #tpu.memory_space<vmem>>, vector<1x128xf32>
    %18 = vector.broadcast %17 : vector<1x128xf32> to vector<8x128xf32>
    %19 = arith.mulf %16, %18 : vector<8x128xf32>
    %cst_14 = arith.constant dense<0.000000e+00> : vector<8xf32>
    %20 = vector.multi_reduction <add>, %19, %cst_14 [1] : vector<8x128xf32> to vector<8xf32>
    %c0_15 = arith.constant 0 : index
    %21 = memref.load %arg7[%c0_15] : memref<1xf32, #tpu.memory_space<smem>>
    %22 = vector.broadcast %21 : f32 to vector<8xf32>
    %23 = arith.addf %20, %22 : vector<8xf32>
    %24 = vector.shape_cast %23 : vector<8xf32> to vector<1x8xf32>
    %c0_16 = arith.constant 0 : index
    %c0_17 = arith.constant 0 : index
    %c0_18 = arith.constant 0 : index
    %25 = vector.load %arg8[%c0_16, %c0_17, %c0_18] : memref<1x1x8xf32, #tpu.memory_space<vmem>>, vector<1x1x8xf32>
    %26 = vector.shape_cast %25 : vector<1x1x8xf32> to vector<1x8xf32>
    %27 = vector.shape_cast %24 : vector<1x8xf32> to vector<1x1x8xf32>
    tpu.vector_store %arg8[%c0_16, %c0_17, %c0_18], %27 {strides = array<i32>} : memref<1x1x8xf32, #tpu.memory_space<vmem>>, vector<1x1x8xf32>,
    return
  }
  func.func @transform_0(%arg0: i32) -> (i32, i32) {
    %c0_i32 = arith.constant 0 : i32
    %c0_i32_0 = arith.constant 0 : i32
    return %arg0, %c0_i32 : i32, i32
  }
  func.func @transform_1(%arg0: i32) -> (i32, i32) {
    %c0_i32 = arith.constant 0 : i32
    %c0_i32_0 = arith.constant 0 : i32
    %c0_i32_1 = arith.constant 0 : i32
    return %c0_i32, %c0_i32_0 : i32, i32
  }
  func.func @transform_2(%arg0: i32) -> (i32, i32) {
    %c0_i32 = arith.constant 0 : i32
    %c0_i32_0 = arith.constant 0 : i32
    %c0_i32_1 = arith.constant 0 : i32
    return %c0_i32, %c0_i32_0 : i32, i32
  }
  func.func @transform_3(%arg0: i32) -> (i32, i32) {
    %c0_i32 = arith.constant 0 : i32
    %c0_i32_0 = arith.constant 0 : i32
    %c0_i32_1 = arith.constant 0 : i32
    return %c0_i32, %c0_i32_0 : i32, i32
  }
  func.func @transform_4(%arg0: i32) -> (i32, i32) {
    %c0_i32 = arith.constant 0 : i32
    %c0_i32_0 = arith.constant 0 : i32
    %c0_i32_1 = arith.constant 0 : i32
    return %c0_i32, %c0_i32_0 : i32, i32
  }
  func.func @transform_5(%arg0: i32) -> (i32, i32) {
    %c0_i32 = arith.constant 0 : i32
    %c0_i32_0 = arith.constant 0 : i32
    %c0_i32_1 = arith.constant 0 : i32
    return %c0_i32, %c0_i32_0 : i32, i32
  }
  func.func @transform_6(%arg0: i32) -> i32 {
    %c0_i32 = arith.constant 0 : i32
    %c0_i32_0 = arith.constant 0 : i32
    return %c0_i32 : i32
  }
  func.func @transform_7(%arg0: i32) -> (i32, i32, i32) {
    %c0_i32 = arith.constant 0 : i32
    %c0_i32_0 = arith.constant 0 : i32
    %c0_i32_1 = arith.constant 0 : i32
    return %arg0, %c0_i32, %c0_i32_0 : i32, i32, i32
  }
}

module attributes {stable_mosaic.version = 11 : i64} {
  func.func @value_network_kernel(%arg0: i32, %arg1: memref<8x16xf32, #tpu.memory_space<vmem>>, %arg2: memref<16x128xbf16, #tpu.memory_space<vmem>>, %arg3: memref<1x128xf32, #tpu.memory_space<vmem>>, %arg4: memref<128x128xbf16, #tpu.memory_space<vmem>>, %arg5: memref<1x128xf32, #tpu.memory_space<vmem>>, %arg6: memref<1x128xf32, #tpu.memory_space<vmem>>, %arg7: memref<1xf32, #tpu.memory_space<smem>>, %arg8: memref<1x1x8xf32, #tpu.memory_space<vmem>>) attributes {dimension_semantics = [#tpu.dimension_semantics<parallel>], iteration_bounds = array<i64: 1>, scalar_prefetch = 0 : i64, scratch_operands = 0 : i64, tpu.core_type = #tpu.core_type<tc>, window_params = [{transform_indices = @transform_0, window_bounds = array<i64: 8, 16>}, {pipeline_mode = #tpu.pipeline_mode<synchronous>, transform_indices = @transform_1, window_bounds = array<i64: 16, 128>}, {pipeline_mode = #tpu.pipeline_mode<synchronous>, transform_indices = @transform_2, window_bounds = array<i64: 1, 128>}, {pipeline_mode = #tpu.pipeline_mode<synchronous>, transform_indices = @transform_3, window_bounds = array<i64: 128, 128>}, {pipeline_mode = #tpu.pipeline_mode<synchronous>, transform_indices = @transform_4, window_bounds = array<i64: 1, 128>}, {pipeline_mode = #tpu.pipeline_mode<synchronous>, transform_indices = @transform_5, window_bounds = array<i64: 1, 128>}, {transform_indices = @transform_6, window_bounds = array<i64: 1>}, {transform_indices = @transform_7, window_bounds = array<i64: 1, 1, 8>}]} {
    %c0 = arith.constant 0 : index
    %c0_0 = arith.constant 0 : index
    %0 = vector.load %arg1[%c0, %c0_0] : memref<8x16xf32, #tpu.memory_space<vmem>>, vector<8x16xf32>
    %1 = arith.truncf %0 : vector<8x16xf32> to vector<8x16xbf16>
    %c0_1 = arith.constant 0 : index
    %c0_2 = arith.constant 0 : index
    %2 = vector.load %arg2[%c0_1, %c0_2] : memref<16x128xbf16, #tpu.memory_space<vmem>>, vector<16x128xbf16>
    %cst = arith.constant dense<0.000000e+00> : vector<8x128xf32>
    %3 = tpu.matmul %1, %2, %cst {dimension_numbers = #tpu.dot_dimension_numbers<[1], [0], [0], [1], [0, 0, 1, 1], [], []>} : vector<8x16xbf16>, vector<16x128xbf16>, vector<8x128xf32> -> vector<8x128xf32>
    %c0_3 = arith.constant 0 : index
    %c0_4 = arith.constant 0 : index
    %4 = vector.load %arg3[%c0_3, %c0_4] : memref<1x128xf32, #tpu.memory_space<vmem>>, vector<1x128xf32>
    %5 = vector.broadcast %4 : vector<1x128xf32> to vector<8x128xf32>
    %6 = arith.addf %3, %5 : vector<8x128xf32>
    %cst_5 = arith.constant 0.000000e+00 : f32
    %7 = vector.broadcast %cst_5 : f32 to vector<8x128xf32>
    %8 = arith.maximumf %6, %7 : vector<8x128xf32>
    %9 = arith.truncf %8 : vector<8x128xf32> to vector<8x128xbf16>
    %c0_6 = arith.constant 0 : index
    %c0_7 = arith.constant 0 : index
    %10 = vector.load %arg4[%c0_6, %c0_7] : memref<128x128xbf16, #tpu.memory_space<vmem>>, vector<128x128xbf16>
    %cst_8 = arith.constant dense<0.000000e+00> : vector<8x128xf32>
    %11 = tpu.matmul %9, %10, %cst_8 {dimension_numbers = #tpu.dot_dimension_numbers<[1], [0], [0], [1], [0, 0, 1, 1], [], []>} : vector<8x128xbf16>, vector<128x128xbf16>, vector<8x128xf32> -> vector<8x128xf32>
    %c0_9 = arith.constant 0 : index
    %c0_10 = arith.constant 0 : index
    %12 = vector.load %arg5[%c0_9, %c0_10] : memref<1x128xf32, #tpu.memory_space<vmem>>, vector<1x128xf32>
    %13 = vector.broadcast %12 : vector<1x128xf32> to vector<8x128xf32>
    %14 = arith.addf %11, %13 : vector<8x128xf32>
    %cst_11 = arith.constant 0.000000e+00 : f32
    %15 = vector.broadcast %cst_11 : f32 to vector<8x128xf32>
    %16 = arith.maximumf %14, %15 : vector<8x128xf32>
    %c0_12 = arith.constant 0 : index
    %c0_13 = arith.constant 0 : index
    %17 = vector.load %arg6[%c0_12, %c0_13] : memref<1x128xf32, #tpu.memory_space<vmem>>, vector<1x128xf32>
    %18 = vector.broadcast %17 : vector<1x128xf32> to vector<8x128xf32>
    %19 = arith.mulf %16, %18 : vector<8x128xf32>
    %cst_14 = arith.constant dense<0.000000e+00> : vector<8xf32>
    %20 = vector.multi_reduction <add>, %19, %cst_14 [1] : vector<8x128xf32> to vector<8xf32>
    %c0_15 = arith.constant 0 : index
    %21 = memref.load %arg7[%c0_15] : memref<1xf32, #tpu.memory_space<smem>>
    %22 = vector.broadcast %21 : f32 to vector<8xf32>
    %23 = arith.addf %20, %22 : vector<8xf32>
    %24 = vector.shape_cast %23 : vector<8xf32> to vector<1x8xf32>
    %c0_16 = arith.constant 0 : index
    %c0_17 = arith.constant 0 : index
    %c0_18 = arith.constant 0 : index
    %25 = vector.load %arg8[%c0_16, %c0_17, %c0_18] : memref<1x1x8xf32, #tpu.memory_space<vmem>>, vector<1x1x8xf32>
    %26 = vector.shape_cast %25 : vector<1x1x8xf32> to vector<1x8xf32>
    %27 = vector.shape_cast %24 : vector<1x8xf32> to vector<1x1x8xf32>
    tpu.vector_store %arg8[%c0_16, %c0_17, %c0_18], %27 {strides = array<i32>} : memref<1x1x8xf32, #tpu.memory_space<vmem>>, vector<1x1x8xf32>,
    return
  }
  func.func @transform_0(%arg0: i32) -> (i32, i32) {
    %c0_i32 = arith.constant 0 : i32
    %c0_i32_0 = arith.constant 0 : i32
    return %arg0, %c0_i32 : i32, i32
  }
  func.func @transform_1(%arg0: i32) -> (i32, i32) {
    %c0_i32 = arith.constant 0 : i32
    %c0_i32_0 = arith.constant 0 : i32
    %c0_i32_1 = arith.constant 0 : i32
    return %c0_i32, %c0_i32_0 : i32, i32
  }
  func.func @transform_2(%arg0: i32) -> (i32, i32) {
    %c0_i32 = arith.constant 0 : i32
    %c0_i32_0 = arith.constant 0 : i32
    %c0_i32_1 = arith.constant 0 : i32
    return %c0_i32, %c0_i32_0 : i32, i32
  }
  func.func @transform_3(%arg0: i32) -> (i32, i32) {
    %c0_i32 = arith.constant 0 : i32
    %c0_i32_0 = arith.constant 0 : i32
    %c0_i32_1 = arith.constant 0 : i32
    return %c0_i32, %c0_i32_0 : i32, i32
  }
  func.func @transform_4(%arg0: i32) -> (i32, i32) {
    %c0_i32 = arith.constant 0 : i32
    %c0_i32_0 = arith.constant 0 : i32
    %c0_i32_1 = arith.constant 0 : i32
    return %c0_i32, %c0_i32_0 : i32, i32
  }
  func.func @transform_5(%arg0: i32) -> (i32, i32) {
    %c0_i32 = arith.constant 0 : i32
    %c0_i32_0 = arith.constant 0 : i32
    %c0_i32_1 = arith.constant 0 : i32
    return %c0_i32, %c0_i32_0 : i32, i32
  }
  func.func @transform_6(%arg0: i32) -> i32 {
    %c0_i32 = arith.constant 0 : i32
    %c0_i32_0 = arith.constant 0 : i32
    return %c0_i32 : i32
  }
  func.func @transform_7(%arg0: i32) -> (i32, i32, i32) {
    %c0_i32 = arith.constant 0 : i32
    %c0_i32_0 = arith.constant 0 : i32
    %c0_i32_1 = arith.constant 0 : i32
    return %arg0, %c0_i32, %c0_i32_0 : i32, i32, i32
  }
}

</mosaic_0001>

<llo_original>
// kernel: tpu_custom_call.1
$region0: #{tpu_custom_call.1}
  #allocation0 [shape = 'u32[]', space=smem, size = 0x4, offset = 0x4, fixed_abs, tag = 'smem constant byte address 0x4 - core index']
  #allocation1 [shape = 'u32[144,128]{1,0:T(1,128)}', space=vmem, size = 0x12000, scoped, tag = 'internal scratch']
  #allocation2 [shape = 'f32[1]{0:T(128)S(6)}', space=smem, size = 0x200, scoped, tag = 'scoped memory for tpu_custom_call.1']
  %s0 = inlined_call_operand.hbm [shape: f32[8,16], index: 0, kind: input, shape index: {}]
  %s1 = inlined_call_operand.hbm [shape: bf16[16,128], index: 1, kind: input, shape index: {}]
  %s2 = inlined_call_operand.vmem [shape: f32[1,128], index: 2, kind: input, shape index: {}]
  %s3 = inlined_call_operand.hbm [shape: bf16[128,128], index: 3, kind: input, shape index: {}]
  %s4 = inlined_call_operand.vmem [shape: f32[1,128], index: 4, kind: input, shape index: {}]
  %s5 = inlined_call_operand.vmem [shape: f32[1,128], index: 5, kind: input, shape index: {}]
  %s6 = inlined_call_operand.<no memory space> [shape: f32[1], index: 6, kind: input, shape index: {}]
  %s7 = inlined_call_operand.hbm [shape: f32[1,1,8], index: 7, kind: output, shape index: {}]
  %s8 = sld [smem:[#allocation0]]
  $region50: #{tpu_custom_call.1} parent=0
    _
  %s10 = ssub.s32 1, %s8
  %s11 = scalar_select 0, %s10, %s8
  %12 = sst [smem:[#allocation2]] %s6
  $region1: #{tpu_custom_call.1} parent=0
    #allocation3 [shape = 'u8[4096]{0}', space=vmem, size = 0x1000, scoped, tag = 'input window, operand 0, single buffered']
    #allocation4 [shape = 's32[1]{0}', space=sflag, size = 0x4, scoped, tag = 'scoped memory for tpu_custom_call.1']
    #allocation5 [shape = 's32[1]{0}', space=sflag, size = 0x4, scoped, tag = 'scoped memory for tpu_custom_call.1']
    #allocation6 [shape = 'u8[4096]{0}', space=vmem, size = 0x1000, scoped, tag = 'input window, operand 1, single buffered']
    #allocation7 [shape = 's32[1]{0}', space=sflag, size = 0x4, scoped, tag = 'scoped memory for tpu_custom_call.1']
    #allocation8 [shape = 'u8[32768]{0}', space=vmem, size = 0x8000, scoped, tag = 'input window, operand 3, single buffered']
    #allocation9 [shape = 'u8[512]{0}', space=vmem, size = 0x400, scoped, tag = 'output window, operand 0, single buffered']
    %13 = vsyncpa [#allocation4], 0
    %14 = vsyncpa [#allocation7], 0
    %15 = vsyncpa [#allocation5], 0
    // Predicated region
    $region2: #{tpu_custom_call.1} parent=1 // pred_check
      _
    $region3: #{tpu_custom_call.1} parent=1 // pred_check_branch
      %17 = sbr.rel (0) target = $region5
    $region4: #{tpu_custom_call.1} parent=1 // pred_region
      %s19 = ssub.s32 128, 128
      %20 = vsyncadd [#allocation4], %s19
      %s22 = sshll.u32 [#allocation3], 4
      %s23 = int_to_ptr.vmem [resolvable:$true] %s22
      %25 = dma.hbm_to_vmem [thread:$0]  %s0, 128, %s23, [#allocation4]
    $region5: #{tpu_custom_call.1} parent=1 // pred_fallthru
      _
    // Predicated region
    $region6: #{tpu_custom_call.1} parent=1 // pred_check
      _
    $region7: #{tpu_custom_call.1} parent=1 // pred_check_branch
      %27 = sbr.rel (0) target = $region9
    $region8: #{tpu_custom_call.1} parent=1 // pred_region
      %s29 = ssub.s32 128, 128
      %30 = vsyncadd [#allocation7], %s29
      %s31 = sshll.u32 [#allocation6], 4
      %s32 = int_to_ptr.vmem [resolvable:$true] %s31
      %37 = dma.hbm_to_vmem [thread:$0]  %s1, 128, %s32, [#allocation7], 64, 64, 4
    $region9: #{tpu_custom_call.1} parent=1 // pred_fallthru
      _
    // Predicated region
    $region10: #{tpu_custom_call.1} parent=1 // pred_check
      _
    $region11: #{tpu_custom_call.1} parent=1 // pred_check_branch
      %39 = sbr.rel (0) target = $region13
    $region12: #{tpu_custom_call.1} parent=1 // pred_region
      _
    $region13: #{tpu_custom_call.1} parent=1 // pred_fallthru
      _
    // Predicated region
    $region14: #{tpu_custom_call.1} parent=1 // pred_check
      _
    $region15: #{tpu_custom_call.1} parent=1 // pred_check_branch
      %41 = sbr.rel (0) target = $region17
    $region16: #{tpu_custom_call.1} parent=1 // pred_region
      %s43 = ssub.s32 1024, 1024
      %44 = vsyncadd [#allocation7], %s43
      %s45 = sshll.u32 [#allocation8], 4
      %s46 = int_to_ptr.vmem [resolvable:$true] %s45
      %51 = dma.hbm_to_vmem [thread:$0]  %s3, 1024, %s46, [#allocation7], 64, 64, 4
    $region17: #{tpu_custom_call.1} parent=1 // pred_fallthru
      _
    // Predicated region
    $region18: #{tpu_custom_call.1} parent=1 // pred_check
      _
    $region19: #{tpu_custom_call.1} parent=1 // pred_check_branch
      %53 = sbr.rel (0) target = $region21
    $region20: #{tpu_custom_call.1} parent=1 // pred_region
      _
    $region21: #{tpu_custom_call.1} parent=1 // pred_fallthru
      _
    // Predicated region
    $region22: #{tpu_custom_call.1} parent=1 // pred_check
      _
    $region23: #{tpu_custom_call.1} parent=1 // pred_check_branch
      %55 = sbr.rel (0) target = $region25
    $region24: #{tpu_custom_call.1} parent=1 // pred_region
      _
    $region25: #{tpu_custom_call.1} parent=1 // pred_fallthru
      _
    // Predicated region
    $region26: #{tpu_custom_call.1} parent=1 // pred_check
      _
    $region27: #{tpu_custom_call.1} parent=1 // pred_check_branch
      %57 = sbr.rel (0) target = $region29
    $region28: #{tpu_custom_call.1} parent=1 // pred_region
      _
    $region29: #{tpu_custom_call.1} parent=1 // pred_fallthru
      _
    // Predicated region
    $region30: #{tpu_custom_call.1} parent=1 // pred_check
      _
    $region31: #{tpu_custom_call.1} parent=1 // pred_check_branch
      %59 = sbr.rel (0) target = $region33
    $region32: #{tpu_custom_call.1} parent=1 // pred_region
      %60 = dma.done [#allocation4], 128
    $region33: #{tpu_custom_call.1} parent=1 // pred_fallthru
      _
    // Predicated region
    $region34: #{tpu_custom_call.1} parent=1 // pred_check
      _
    $region35: #{tpu_custom_call.1} parent=1 // pred_check_branch
      %62 = sbr.rel (0) target = $region37
    $region36: #{tpu_custom_call.1} parent=1 // pred_region
      %63 = dma.done [#allocation7], 128
    $region37: #{tpu_custom_call.1} parent=1 // pred_fallthru
      _
    // Predicated region
    $region38: #{tpu_custom_call.1} parent=1 // pred_check
      _
    $region39: #{tpu_custom_call.1} parent=1 // pred_check_branch
      %65 = sbr.rel (0) target = $region41
    $region40: #{tpu_custom_call.1} parent=1 // pred_region
      %66 = dma.done [#allocation7], 1024
    $region41: #{tpu_custom_call.1} parent=1 // pred_fallthru
      _
    %v68 = vld [vmem:[#allocation3] sm:$0xff]
    %v69 = vpack.c.bf16 %v68, %v68
    %v70 = vld [vmem:[#allocation6] sm:$0xf]
    %v71 = vld [vmem:[#allocation6 + $0x4] sm:$0xf]
    %v72 = vld [vmem:[%s2] sm:$0x1]
    %v74 = vlaneseq
    %v75 = vshrl.u32 %v74, 7
    %v76 = vsub.s32 0, %v75
    %v77 = vrot.slane %v72, %v76
    %v81 = vunpack.c.l.b16 %v70
    %v82 = vunpack.c.l.b16 %v71
    %v83 = vpack.c.b16 %v82, %v81
    %vm85 = vcmask 130048
    %v87 = vsel %vm85, %v69, 0
    %89 = vmatprep.subr.bf16.mxu0 0
    %90 = vmatpush1.bf16.msra.mxu0 %v83
    %91 = vmatprep.subr.bf16.mxu0 0
    %92 = vmatpush1.bf16.msra.mxu0 0
    %93 = vmatprep.subr.bf16.mxu0 0
    %94 = vmatpush1.bf16.msra.mxu0 0
    %95 = vmatprep.subr.bf16.mxu0 0
    %96 = vmatpush1.bf16.msra.mxu0 0
    %97 = vmatprep.subr.bf16.mxu0 0
    %98 = vmatpush1.bf16.msra.mxu0 0
    %99 = vmatprep.subr.bf16.mxu0 0
    %100 = vmatpush1.bf16.msra.mxu0 0
    %101 = vmatprep.subr.bf16.mxu0 0
    %102 = vmatpush1.bf16.msra.mxu0 0
    %103 = vmatprep.subr.bf16.mxu0 0
    %104 = vmatpush1.bf16.msra.mxu0 0
    %105 = vmatprep.subr.bf16.mxu0 0
    %106 = vmatpush1.bf16.msra.mxu0 0
    %107 = vmatprep.subr.bf16.mxu0 0
    %108 = vmatpush1.bf16.msra.mxu0 0
    %109 = vmatprep.subr.bf16.mxu0 0
    %110 = vmatpush1.bf16.msra.mxu0 0
    %111 = vmatprep.subr.bf16.mxu0 0
    %112 = vmatpush1.bf16.msra.mxu0 0
    %113 = vmatprep.subr.bf16.mxu0 0
    %114 = vmatpush1.bf16.msra.mxu0 0
    %115 = vmatprep.subr.bf16.mxu0 0
    %116 = vmatpush1.bf16.msra.mxu0 0
    %117 = vmatprep.subr.bf16.mxu0 0
    %118 = vmatpush1.bf16.msra.mxu0 0
    %119 = vmatprep.subr.bf16.mxu0 0
    %120 = vmatpush1.bf16.msra.mxu0 0
    %121 = vmatprep.mubr.bf16.mxu0 0
    %122 = vmatmul.mubr.bf16.gmra.mrb[0].mxu0 %v87
    %v123 = vpop.f32.mrb[0].mxu0
    %v124 = vadd.f32 %v77, %v123
    %v125 = vpop.f32.mrb[0].mxu0
    %v126 = vpop.f32.mrb[0].mxu0
    %v127 = vpop.f32.mrb[0].mxu0
    %128 = vdwg.mxu0
    %v129 = vmax.f32 %v124, 0.0
    %v130 = vpack.c.bf16 %v129, %v129
    %v131 = vld [vmem:[#allocation8] sm:$0xf]
    %v132 = vld [vmem:[#allocation8 + $0x4] sm:$0xf]
    %v133 = vld [vmem:[#allocation8 + $0x8] sm:$0xf]
    %v134 = vld [vmem:[#allocation8 + $0xc] sm:$0xf]
    %v135 = vld [vmem:[#allocation8 + $0x10] sm:$0xf]
    %v136 = vld [vmem:[#allocation8 + $0x14] sm:$0xf]
    %v137 = vld [vmem:[#allocation8 + $0x18] sm:$0xf]
    %v138 = vld [vmem:[#allocation8 + $0x1c] sm:$0xf]
    %v139 = vld [vmem:[#allocation8 + $0x20] sm:$0xf]
    %v140 = vld [vmem:[#allocation8 + $0x24] sm:$0xf]
    %v141 = vld [vmem:[#allocation8 + $0x28] sm:$0xf]
    %v142 = vld [vmem:[#allocation8 + $0x2c] sm:$0xf]
    %v143 = vld [vmem:[#allocation8 + $0x30] sm:$0xf]
    %v144 = vld [vmem:[#allocation8 + $0x34] sm:$0xf]
    %v145 = vld [vmem:[#allocation8 + $0x38] sm:$0xf]
    %v146 = vld [vmem:[#allocation8 + $0x3c] sm:$0xf]
    %v147 = vld [vmem:[%s4] sm:$0x1]
    %v149 = vlaneseq
    %v150 = vshrl.u32 %v149, 7
    %v151 = vsub.s32 0, %v150
    %v152 = vrot.slane %v147, %v151
    %v170 = vunpack.c.l.b16 %v131
    %v171 = vunpack.c.l.b16 %v132
    %v172 = vunpack.c.l.b16 %v133
    %v173 = vunpack.c.l.b16 %v134
    %v174 = vunpack.c.l.b16 %v135
    %v175 = vunpack.c.l.b16 %v136
    %v176 = vunpack.c.l.b16 %v137
    %v177 = vunpack.c.l.b16 %v138
    %v178 = vunpack.c.l.b16 %v139
    %v179 = vunpack.c.l.b16 %v140
    %v180 = vunpack.c.l.b16 %v141
    %v181 = vunpack.c.l.b16 %v142
    %v182 = vunpack.c.l.b16 %v143
    %v183 = vunpack.c.l.b16 %v144
    %v184 = vunpack.c.l.b16 %v145
    %v185 = vunpack.c.l.b16 %v146
    %v186 = vpack.c.b16 %v171, %v170
    %v187 = vpack.c.b16 %v173, %v172
    %v188 = vpack.c.b16 %v175, %v174
    %v189 = vpack.c.b16 %v177, %v176
    %v190 = vpack.c.b16 %v179, %v178
    %v191 = vpack.c.b16 %v181, %v180
    %v192 = vpack.c.b16 %v183, %v182
    %v193 = vpack.c.b16 %v185, %v184
    %202 = vmatprep.subr.bf16.mxu0 0
    %203 = vmatpush1.bf16.msra.mxu0 %v186
    %204 = vmatprep.subr.bf16.mxu0 0
    %205 = vmatpush1.bf16.msra.mxu0 %v187
    %206 = vmatprep.subr.bf16.mxu0 0
    %207 = vmatpush1.bf16.msra.mxu0 %v188
    %208 = vmatprep.subr.bf16.mxu0 0
    %209 = vmatpush1.bf16.msra.mxu0 %v189
    %210 = vmatprep.subr.bf16.mxu0 0
    %211 = vmatpush1.bf16.msra.mxu0 %v190
    %212 = vmatprep.subr.bf16.mxu0 0
    %213 = vmatpush1.bf16.msra.mxu0 %v191
    %214 = vmatprep.subr.bf16.mxu0 0
    %215 = vmatpush1.bf16.msra.mxu0 %v192
    %216 = vmatprep.subr.bf16.mxu0 0
    %217 = vmatpush1.bf16.msra.mxu0 %v193
    %218 = vmatprep.subr.bf16.mxu0 0
    %219 = vmatpush1.bf16.msra.mxu0 0
    %220 = vmatprep.subr.bf16.mxu0 0
    %221 = vmatpush1.bf16.msra.mxu0 0
    %222 = vmatprep.subr.bf16.mxu0 0
    %223 = vmatpush1.bf16.msra.mxu0 0
    %224 = vmatprep.subr.bf16.mxu0 0
    %225 = vmatpush1.bf16.msra.mxu0 0
    %226 = vmatprep.subr.bf16.mxu0 0
    %227 = vmatpush1.bf16.msra.mxu0 0
    %228 = vmatprep.subr.bf16.mxu0 0
    %229 = vmatpush1.bf16.msra.mxu0 0
    %230 = vmatprep.subr.bf16.mxu0 0
    %231 = vmatpush1.bf16.msra.mxu0 0
    %232 = vmatprep.subr.bf16.mxu0 0
    %233 = vmatpush1.bf16.msra.mxu0 0
    %234 = vmatprep.mubr.bf16.mxu0 0
    %235 = vmatmul.mubr.bf16.gmra.mrb[0].mxu0 %v130
    %v236 = vpop.f32.mrb[0].mxu0
    %v237 = vadd.f32 %v152, %v236
    %v238 = vpop.f32.mrb[0].mxu0
    %v239 = vpop.f32.mrb[0].mxu0
    %v240 = vpop.f32.mrb[0].mxu0
    %241 = vdwg.mxu0
    %v242 = vmax.f32 %v237, 0.0
    %v243 = vld [vmem:[%s5] sm:$0x1]
    %v245 = vlaneseq
    %v246 = vshrl.u32 %v245, 7
    %v247 = vsub.s32 0, %v246
    %v248 = vrot.slane %v243, %v247
    %v250 = vmul.f32 %v242, %v248
    %251 = vadd.xlane.f32.xlu0 %v250
    %v252 = vpop.xlane.xlu0 %251
    %s253 = sld [smem:[#allocation2]]
    %v254 = vstv %s253
    %v255 = vadd.f32 %v252, %v254
    %v257 = vlaneseq
    %v258 = vand.u32 %v257, 127
    %v259 = vlaneseq
    %v260 = vshrl.u32 %v259, 7
    %v261 = vsub.s32 %v258, %v260
    %v262 = vrot.slane %v255, %v261
    %vm264 = vcmask 57344
    %265 = vst.msk [vmem:[#allocation9] sm:$0x1] %vm264, %v262
    // Predicated region
    $region42: #{tpu_custom_call.1} parent=1 // pred_check
      _
    $region43: #{tpu_custom_call.1} parent=1 // pred_check_branch
      %267 = sbr.rel (0) target = $region45
    $region44: #{tpu_custom_call.1} parent=1 // pred_region
      %s269 = ssub.s32 16, 16
      %270 = vsyncadd [#allocation5], %s269
      %s272 = sshll.u32 [#allocation9], 4
      %s273 = int_to_ptr.vmem [resolvable:$true] %s272
      %275 = dma.vmem_to_hbm [thread:$0]  %s273, 16, %s7, [#allocation5]
    $region45: #{tpu_custom_call.1} parent=1 // pred_fallthru
      _
    // Predicated region
    $region46: #{tpu_custom_call.1} parent=1 // pred_check
      _
    $region47: #{tpu_custom_call.1} parent=1 // pred_check_branch
      %277 = sbr.rel (0) target = $region49
    $region48: #{tpu_custom_call.1} parent=1 // pred_region
      %278 = dma.done [#allocation5], 16
    $region49: #{tpu_custom_call.1} parent=1 // pred_fallthru
      _
    %279 = vsyncpa [#allocation4], 1
    %280 = vsyncpa [#allocation7], 1
    %281 = vsyncpa [#allocation5], 1

// kernel: tpu_custom_call.1
$region0: #{tpu_custom_call.1}
  #allocation0 [shape = 'u32[]', space=smem, size = 0x4, offset = 0x4, fixed_abs, tag = 'smem constant byte address 0x4 - core index']
  #allocation1 [shape = 'u32[144,128]{1,0:T(1,128)}', space=vmem, size = 0x12000, scoped, tag = 'internal scratch']
  #allocation2 [shape = 'f32[1]{0:T(128)S(6)}', space=smem, size = 0x200, scoped, tag = 'scoped memory for tpu_custom_call.1']
  %s0 = inlined_call_operand.hbm [shape: f32[8,16], index: 0, kind: input, shape index: {}]
  %s1 = inlined_call_operand.hbm [shape: bf16[16,128], index: 1, kind: input, shape index: {}]
  %s2 = inlined_call_operand.vmem [shape: f32[1,128], index: 2, kind: input, shape index: {}]
  %s3 = inlined_call_operand.hbm [shape: bf16[128,128], index: 3, kind: input, shape index: {}]
  %s4 = inlined_call_operand.vmem [shape: f32[1,128], index: 4, kind: input, shape index: {}]
  %s5 = inlined_call_operand.vmem [shape: f32[1,128], index: 5, kind: input, shape index: {}]
  %s6 = inlined_call_operand.<no memory space> [shape: f32[1], index: 6, kind: input, shape index: {}]
  %s7 = inlined_call_operand.hbm [shape: f32[1,1,8], index: 7, kind: output, shape index: {}]
  %s8 = sld [smem:[#allocation0]]
  $region50: #{tpu_custom_call.1} parent=0
    _
  %s10 = ssub.s32 1, %s8
  %s11 = scalar_select 0, %s10, %s8
  %12 = sst [smem:[#allocation2]] %s6
  $region1: #{tpu_custom_call.1} parent=0
    #allocation3 [shape = 'u8[4096]{0}', space=vmem, size = 0x1000, scoped, tag = 'input window, operand 0, single buffered']
    #allocation4 [shape = 's32[1]{0}', space=sflag, size = 0x4, scoped, tag = 'scoped memory for tpu_custom_call.1']
    #allocation5 [shape = 's32[1]{0}', space=sflag, size = 0x4, scoped, tag = 'scoped memory for tpu_custom_call.1']
    #allocation6 [shape = 'u8[4096]{0}', space=vmem, size = 0x1000, scoped, tag = 'input window, operand 1, single buffered']
    #allocation7 [shape = 's32[1]{0}', space=sflag, size = 0x4, scoped, tag = 'scoped memory for tpu_custom_call.1']
    #allocation8 [shape = 'u8[32768]{0}', space=vmem, size = 0x8000, scoped, tag = 'input window, operand 3, single buffered']
    #allocation9 [shape = 'u8[512]{0}', space=vmem, size = 0x400, scoped, tag = 'output window, operand 0, single buffered']
    %13 = vsyncpa [#allocation4], 0
    %14 = vsyncpa [#allocation7], 0
    %15 = vsyncpa [#allocation5], 0
    // Predicated region
    $region2: #{tpu_custom_call.1} parent=1 // pred_check
      _
    $region3: #{tpu_custom_call.1} parent=1 // pred_check_branch
      %17 = sbr.rel (0) target = $region5
    $region4: #{tpu_custom_call.1} parent=1 // pred_region
      %s19 = ssub.s32 128, 128
      %20 = vsyncadd [#allocation4], %s19
      %s22 = sshll.u32 [#allocation3], 4
      %s23 = int_to_ptr.vmem [resolvable:$true] %s22
      %25 = dma.hbm_to_vmem [thread:$0]  %s0, 128, %s23, [#allocation4]
    $region5: #{tpu_custom_call.1} parent=1 // pred_fallthru
      _
    // Predicated region
    $region6: #{tpu_custom_call.1} parent=1 // pred_check
      _
    $region7: #{tpu_custom_call.1} parent=1 // pred_check_branch
      %27 = sbr.rel (0) target = $region9
    $region8: #{tpu_custom_call.1} parent=1 // pred_region
      %s29 = ssub.s32 128, 128
      %30 = vsyncadd [#allocation7], %s29
      %s31 = sshll.u32 [#allocation6], 4
      %s32 = int_to_ptr.vmem [resolvable:$true] %s31
      %37 = dma.hbm_to_vmem [thread:$0]  %s1, 128, %s32, [#allocation7], 64, 64, 4
    $region9: #{tpu_custom_call.1} parent=1 // pred_fallthru
      _
    // Predicated region
    $region10: #{tpu_custom_call.1} parent=1 // pred_check
      _
    $region11: #{tpu_custom_call.1} parent=1 // pred_check_branch
      %39 = sbr.rel (0) target = $region13
    $region12: #{tpu_custom_call.1} parent=1 // pred_region
      _
    $region13: #{tpu_custom_call.1} parent=1 // pred_fallthru
      _
    // Predicated region
    $region14: #{tpu_custom_call.1} parent=1 // pred_check
      _
    $region15: #{tpu_custom_call.1} parent=1 // pred_check_branch
      %41 = sbr.rel (0) target = $region17
    $region16: #{tpu_custom_call.1} parent=1 // pred_region
      %s43 = ssub.s32 1024, 1024
      %44 = vsyncadd [#allocation7], %s43
      %s45 = sshll.u32 [#allocation8], 4
      %s46 = int_to_ptr.vmem [resolvable:$true] %s45
      %51 = dma.hbm_to_vmem [thread:$0]  %s3, 1024, %s46, [#allocation7], 64, 64, 4
    $region17: #{tpu_custom_call.1} parent=1 // pred_fallthru
      _
    // Predicated region
    $region18: #{tpu_custom_call.1} parent=1 // pred_check
      _
    $region19: #{tpu_custom_call.1} parent=1 // pred_check_branch
      %53 = sbr.rel (0) target = $region21
    $region20: #{tpu_custom_call.1} parent=1 // pred_region
      _
    $region21: #{tpu_custom_call.1} parent=1 // pred_fallthru
      _
    // Predicated region
    $region22: #{tpu_custom_call.1} parent=1 // pred_check
      _
    $region23: #{tpu_custom_call.1} parent=1 // pred_check_branch
      %55 = sbr.rel (0) target = $region25
    $region24: #{tpu_custom_call.1} parent=1 // pred_region
      _
    $region25: #{tpu_custom_call.1} parent=1 // pred_fallthru
      _
    // Predicated region
    $region26: #{tpu_custom_call.1} parent=1 // pred_check
      _
    $region27: #{tpu_custom_call.1} parent=1 // pred_check_branch
      %57 = sbr.rel (0) target = $region29
    $region28: #{tpu_custom_call.1} parent=1 // pred_region
      _
    $region29: #{tpu_custom_call.1} parent=1 // pred_fallthru
      _
    // Predicated region
    $region30: #{tpu_custom_call.1} parent=1 // pred_check
      _
    $region31: #{tpu_custom_call.1} parent=1 // pred_check_branch
      %59 = sbr.rel (0) target = $region33
    $region32: #{tpu_custom_call.1} parent=1 // pred_region
      %60 = dma.done [#allocation4], 128
    $region33: #{tpu_custom_call.1} parent=1 // pred_fallthru
      _
    // Predicated region
    $region34: #{tpu_custom_call.1} parent=1 // pred_check
      _
    $region35: #{tpu_custom_call.1} parent=1 // pred_check_branch
      %62 = sbr.rel (0) target = $region37
    $region36: #{tpu_custom_call.1} parent=1 // pred_region
      %63 = dma.done [#allocation7], 128
    $region37: #{tpu_custom_call.1} parent=1 // pred_fallthru
      _
    // Predicated region
    $region38: #{tpu_custom_call.1} parent=1 // pred_check
      _
    $region39: #{tpu_custom_call.1} parent=1 // pred_check_branch
      %65 = sbr.rel (0) target = $region41
    $region40: #{tpu_custom_call.1} parent=1 // pred_region
      %66 = dma.done [#allocation7], 1024
    $region41: #{tpu_custom_call.1} parent=1 // pred_fallthru
      _
    %v68 = vld [vmem:[#allocation3] sm:$0xff]
    %v69 = vpack.c.bf16 %v68, %v68
    %v70 = vld [vmem:[#allocation6] sm:$0xf]
    %v71 = vld [vmem:[#allocation6 + $0x4] sm:$0xf]
    %v72 = vld [vmem:[%s2] sm:$0x1]
    %v74 = vlaneseq
    %v75 = vshrl.u32 %v74, 7
    %v76 = vsub.s32 0, %v75
    %v77 = vrot.slane %v72, %v76
    %v81 = vunpack.c.l.b16 %v70
    %v82 = vunpack.c.l.b16 %v71
    %v83 = vpack.c.b16 %v82, %v81
    %vm85 = vcmask 130048
    %v87 = vsel %vm85, %v69, 0
    %89 = vmatprep.subr.bf16.mxu0 0
    %90 = vmatpush1.bf16.msra.mxu0 %v83
    %91 = vmatprep.subr.bf16.mxu0 0
    %92 = vmatpush1.bf16.msra.mxu0 0
    %93 = vmatprep.subr.bf16.mxu0 0
    %94 = vmatpush1.bf16.msra.mxu0 0
    %95 = vmatprep.subr.bf16.mxu0 0
    %96 = vmatpush1.bf16.msra.mxu0 0
    %97 = vmatprep.subr.bf16.mxu0 0
    %98 = vmatpush1.bf16.msra.mxu0 0
    %99 = vmatprep.subr.bf16.mxu0 0
    %100 = vmatpush1.bf16.msra.mxu0 0
    %101 = vmatprep.subr.bf16.mxu0 0
    %102 = vmatpush1.bf16.msra.mxu0 0
    %103 = vmatprep.subr.bf16.mxu0 0
    %104 = vmatpush1.bf16.msra.mxu0 0
    %105 = vmatprep.subr.bf16.mxu0 0
    %106 = vmatpush1.bf16.msra.mxu0 0
    %107 = vmatprep.subr.bf16.mxu0 0
    %108 = vmatpush1.bf16.msra.mxu0 0
    %109 = vmatprep.subr.bf16.mxu0 0
    %110 = vmatpush1.bf16.msra.mxu0 0
    %111 = vmatprep.subr.bf16.mxu0 0
    %112 = vmatpush1.bf16.msra.mxu0 0
    %113 = vmatprep.subr.bf16.mxu0 0
    %114 = vmatpush1.bf16.msra.mxu0 0
    %115 = vmatprep.subr.bf16.mxu0 0
    %116 = vmatpush1.bf16.msra.mxu0 0
    %117 = vmatprep.subr.bf16.mxu0 0
    %118 = vmatpush1.bf16.msra.mxu0 0
    %119 = vmatprep.subr.bf16.mxu0 0
    %120 = vmatpush1.bf16.msra.mxu0 0
    %121 = vmatprep.mubr.bf16.mxu0 0
    %122 = vmatmul.mubr.bf16.gmra.mrb[0].mxu0 %v87
    %v123 = vpop.f32.mrb[0].mxu0
    %v124 = vadd.f32 %v77, %v123
    %v125 = vpop.f32.mrb[0].mxu0
    %v126 = vpop.f32.mrb[0].mxu0
    %v127 = vpop.f32.mrb[0].mxu0
    %128 = vdwg.mxu0
    %v129 = vmax.f32 %v124, 0.0
    %v130 = vpack.c.bf16 %v129, %v129
    %v131 = vld [vmem:[#allocation8] sm:$0xf]
    %v132 = vld [vmem:[#allocation8 + $0x4] sm:$0xf]
    %v133 = vld [vmem:[#allocation8 + $0x8] sm:$0xf]
    %v134 = vld [vmem:[#allocation8 + $0xc] sm:$0xf]
    %v135 = vld [vmem:[#allocation8 + $0x10] sm:$0xf]
    %v136 = vld [vmem:[#allocation8 + $0x14] sm:$0xf]
    %v137 = vld [vmem:[#allocation8 + $0x18] sm:$0xf]
    %v138 = vld [vmem:[#allocation8 + $0x1c] sm:$0xf]
    %v139 = vld [vmem:[#allocation8 + $0x20] sm:$0xf]
    %v140 = vld [vmem:[#allocation8 + $0x24] sm:$0xf]
    %v141 = vld [vmem:[#allocation8 + $0x28] sm:$0xf]
    %v142 = vld [vmem:[#allocation8 + $0x2c] sm:$0xf]
    %v143 = vld [vmem:[#allocation8 + $0x30] sm:$0xf]
    %v144 = vld [vmem:[#allocation8 + $0x34] sm:$0xf]
    %v145 = vld [vmem:[#allocation8 + $0x38] sm:$0xf]
    %v146 = vld [vmem:[#allocation8 + $0x3c] sm:$0xf]
    %v147 = vld [vmem:[%s4] sm:$0x1]
    %v149 = vlaneseq
    %v150 = vshrl.u32 %v149, 7
    %v151 = vsub.s32 0, %v150
    %v152 = vrot.slane %v147, %v151
    %v170 = vunpack.c.l.b16 %v131
    %v171 = vunpack.c.l.b16 %v132
    %v172 = vunpack.c.l.b16 %v133
    %v173 = vunpack.c.l.b16 %v134
    %v174 = vunpack.c.l.b16 %v135
    %v175 = vunpack.c.l.b16 %v136
    %v176 = vunpack.c.l.b16 %v137
    %v177 = vunpack.c.l.b16 %v138
    %v178 = vunpack.c.l.b16 %v139
    %v179 = vunpack.c.l.b16 %v140
    %v180 = vunpack.c.l.b16 %v141
    %v181 = vunpack.c.l.b16 %v142
    %v182 = vunpack.c.l.b16 %v143
    %v183 = vunpack.c.l.b16 %v144
    %v184 = vunpack.c.l.b16 %v145
    %v185 = vunpack.c.l.b16 %v146
    %v186 = vpack.c.b16 %v171, %v170
    %v187 = vpack.c.b16 %v173, %v172
    %v188 = vpack.c.b16 %v175, %v174
    %v189 = vpack.c.b16 %v177, %v176
    %v190 = vpack.c.b16 %v179, %v178
    %v191 = vpack.c.b16 %v181, %v180
    %v192 = vpack.c.b16 %v183, %v182
    %v193 = vpack.c.b16 %v185, %v184
    %202 = vmatprep.subr.bf16.mxu0 0
    %203 = vmatpush1.bf16.msra.mxu0 %v186
    %204 = vmatprep.subr.bf16.mxu0 0
    %205 = vmatpush1.bf16.msra.mxu0 %v187
    %206 = vmatprep.subr.bf16.mxu0 0
    %207 = vmatpush1.bf16.msra.mxu0 %v188
    %208 = vmatprep.subr.bf16.mxu0 0
    %209 = vmatpush1.bf16.msra.mxu0 %v189
    %210 = vmatprep.subr.bf16.mxu0 0
    %211 = vmatpush1.bf16.msra.mxu0 %v190
    %212 = vmatprep.subr.bf16.mxu0 0
    %213 = vmatpush1.bf16.msra.mxu0 %v191
    %214 = vmatprep.subr.bf16.mxu0 0
    %215 = vmatpush1.bf16.msra.mxu0 %v192
    %216 = vmatprep.subr.bf16.mxu0 0
    %217 = vmatpush1.bf16.msra.mxu0 %v193
    %218 = vmatprep.subr.bf16.mxu0 0
    %219 = vmatpush1.bf16.msra.mxu0 0
    %220 = vmatprep.subr.bf16.mxu0 0
    %221 = vmatpush1.bf16.msra.mxu0 0
    %222 = vmatprep.subr.bf16.mxu0 0
    %223 = vmatpush1.bf16.msra.mxu0 0
    %224 = vmatprep.subr.bf16.mxu0 0
    %225 = vmatpush1.bf16.msra.mxu0 0
    %226 = vmatprep.subr.bf16.mxu0 0
    %227 = vmatpush1.bf16.msra.mxu0 0
    %228 = vmatprep.subr.bf16.mxu0 0
    %229 = vmatpush1.bf16.msra.mxu0 0
    %230 = vmatprep.subr.bf16.mxu0 0
    %231 = vmatpush1.bf16.msra.mxu0 0
    %232 = vmatprep.subr.bf16.mxu0 0
    %233 = vmatpush1.bf16.msra.mxu0 0
    %234 = vmatprep.mubr.bf16.mxu0 0
    %235 = vmatmul.mubr.bf16.gmra.mrb[0].mxu0 %v130
    %v236 = vpop.f32.mrb[0].mxu0
    %v237 = vadd.f32 %v152, %v236
    %v238 = vpop.f32.mrb[0].mxu0
    %v239 = vpop.f32.mrb[0].mxu0
    %v240 = vpop.f32.mrb[0].mxu0
    %241 = vdwg.mxu0
    %v242 = vmax.f32 %v237, 0.0
    %v243 = vld [vmem:[%s5] sm:$0x1]
    %v245 = vlaneseq
    %v246 = vshrl.u32 %v245, 7
    %v247 = vsub.s32 0, %v246
    %v248 = vrot.slane %v243, %v247
    %v250 = vmul.f32 %v242, %v248
    %251 = vadd.xlane.f32.xlu0 %v250
    %v252 = vpop.xlane.xlu0 %251
    %s253 = sld [smem:[#allocation2]]
    %v254 = vstv %s253
    %v255 = vadd.f32 %v252, %v254
    %v257 = vlaneseq
    %v258 = vand.u32 %v257, 127
    %v259 = vlaneseq
    %v260 = vshrl.u32 %v259, 7
    %v261 = vsub.s32 %v258, %v260
    %v262 = vrot.slane %v255, %v261
    %vm264 = vcmask 57344
    %265 = vst.msk [vmem:[#allocation9] sm:$0x1] %vm264, %v262
    // Predicated region
    $region42: #{tpu_custom_call.1} parent=1 // pred_check
      _
    $region43: #{tpu_custom_call.1} parent=1 // pred_check_branch
      %267 = sbr.rel (0) target = $region45
    $region44: #{tpu_custom_call.1} parent=1 // pred_region
      %s269 = ssub.s32 16, 16
      %270 = vsyncadd [#allocation5], %s269
      %s272 = sshll.u32 [#allocation9], 4
      %s273 = int_to_ptr.vmem [resolvable:$true] %s272
      %275 = dma.vmem_to_hbm [thread:$0]  %s273, 16, %s7, [#allocation5]
    $region45: #{tpu_custom_call.1} parent=1 // pred_fallthru
      _
    // Predicated region
    $region46: #{tpu_custom_call.1} parent=1 // pred_check
      _
    $region47: #{tpu_custom_call.1} parent=1 // pred_check_branch
      %277 = sbr.rel (0) target = $region49
    $region48: #{tpu_custom_call.1} parent=1 // pred_region
      %278 = dma.done [#allocation5], 16
    $region49: #{tpu_custom_call.1} parent=1 // pred_fallthru
      _
    %279 = vsyncpa [#allocation4], 1
    %280 = vsyncpa [#allocation7], 1
    %281 = vsyncpa [#allocation5], 1

</llo_original>
